<compile_context>
chip_gen: v7x
topology: tpu7x:2x2x1
jax: 0.10.0
libtpu: 0.0.40
codegen_flags: <defaults>
</compile_context>

<pallas_src>
import jax
import jax.numpy as jnp
from jax.experimental import pallas as pl
from jax.experimental.pallas import tpu as pltpu

# networks_BE_font's Linear(activate='lrelu') uses the standard GAN LeakyReLU slope.
LRELU_SLOPE = 0.2


def _round_up(x, m):
    return (x + m - 1) // m * m


# ----------------------------------------------------------------------------
# Fused kernel:
#   h = x @ W1 + b1
#   h = h @ W2 + b2
#   3x: h = h @ (gamma_i*Wv_i) + gamma_i*bv_i + h      (attention @ 1x1)
#   h = lrelu(h @ W3 + b3)
#   h = lrelu(h @ W4 + b4)
# ----------------------------------------------------------------------------
def _embeding_block_kernel(x_ref, w1_ref, b1_ref, w2_ref, b2_ref,
                           wv_ref, bv_ref, w3_ref, b3_ref, w4_ref, b4_ref,
                           o_ref):
    h = jnp.dot(x_ref[...], w1_ref[...], preferred_element_type=jnp.float32)
    h = h + b1_ref[...]
    h = jnp.dot(h, w2_ref[...], preferred_element_type=jnp.float32) + b2_ref[...]
    # Three self-attention blocks at spatial size 1x1 (softmax == 1).  gamma is
    # pre-folded into the value weights/bias by the wrapper.
    for i in range(wv_ref.shape[0]):  # static, unrolled
        h = jnp.dot(h, wv_ref[i], preferred_element_type=jnp.float32) + bv_ref[i] + h
    h = jnp.dot(h, w3_ref[...], preferred_element_type=jnp.float32) + b3_ref[...]
    h = jnp.where(h > 0, h, LRELU_SLOPE * h)
    h = jnp.dot(h, w4_ref[...], preferred_element_type=jnp.float32) + b4_ref[...]
    h = jnp.where(h > 0, h, LRELU_SLOPE * h)
    o_ref[...] = h.astype(o_ref.dtype)


# ----------------------------------------------------------------------------
# Wrapper: pad to TPU-friendly shapes, one pallas_call for the whole module.
# ----------------------------------------------------------------------------
def embeding_block_forward(params, x, *, tm=512):
    """x: (B, in_channels) f32 -> (B, out_channels) f32."""
    B, in_c = x.shape
    out_c = params["w1"].shape[1]

    # Channel dims padded to multiples of 128 so lane access / stores are
    # unmasked; zero padding is exact (padded channels stay identically 0
    # through every matmul, residual and lrelu).
    cin_p = _round_up(in_c, 128)
    c_p = _round_up(out_c, 128)

    # Row (batch) tile: large tiles cut per-grid-step overhead; cap at 512 so
    # double-buffered in/out tiles stay far below v7x's 64 MiB VMEM while big
    # batches still give several "parallel" grid steps for the 2 TCs on v7x.
    tm = min(tm, _round_up(B, 8))
    bp = _round_up(B, tm)

    def pad2(a, r, c):
        return jnp.pad(a, ((0, r - a.shape[0]), (0, c - a.shape[1])))

    x_p = pad2(x.astype(jnp.float32), bp, cin_p)
    w1 = pad2(params["w1"], cin_p, c_p)
    w2 = pad2(params["w2"], c_p, c_p)
    w3 = pad2(params["w3"], c_p, c_p)
    w4 = pad2(params["w4"], c_p, c_p)
    b1 = pad2(params["b1"].reshape(1, -1), 1, c_p)
    b2 = pad2(params["b2"].reshape(1, -1), 1, c_p)
    b3 = pad2(params["b3"].reshape(1, -1), 1, c_p)
    b4 = pad2(params["b4"].reshape(1, -1), 1, c_p)

    # Fold each attention block's gamma into its value projection:
    #   gamma * (h @ Wv + bv) + h  ==  h @ (gamma*Wv) + (gamma*bv) + h
    gammas = jnp.stack([blk["gamma"] for blk in params["attention"]])          # (3,)
    wv = jnp.stack([pad2(blk["wv"], c_p, c_p) for blk in params["attention"]])  # (3, C, C)
    bv = jnp.stack([pad2(blk["bv"].reshape(1, -1), 1, c_p)
                    for blk in params["attention"]])                            # (3, 1, C)
    wv = wv * gammas[:, None, None]
    bv = bv * gammas[:, None, None]
    n_attn = wv.shape[0]

    grid = (bp // tm,)
    flops = 2 * bp * c_p * (cin_p + (3 + n_attn) * c_p)
    bytes_accessed = 4 * (bp * cin_p + bp * c_p + cin_p * c_p
                          + (3 + n_attn) * c_p * c_p + (4 + n_attn) * c_p)

    out = pl.pallas_call(
        _embeding_block_kernel,
        out_shape=jax.ShapeDtypeStruct((bp, c_p), jnp.float32),
        grid_spec=pltpu.PrefetchScalarGridSpec(
            num_scalar_prefetch=0,
            grid=grid,
            in_specs=[
                pl.BlockSpec((tm, cin_p), lambda i: (i, 0)),            # x row tile
                pl.BlockSpec((cin_p, c_p), lambda i: (0, 0)),           # W1
                pl.BlockSpec((1, c_p), lambda i: (0, 0)),               # b1
                pl.BlockSpec((c_p, c_p), lambda i: (0, 0)),             # W2
                pl.BlockSpec((1, c_p), lambda i: (0, 0)),               # b2
                pl.BlockSpec((n_attn, c_p, c_p), lambda i: (0, 0, 0)),  # gamma*Wv (3 blocks)
                pl.BlockSpec((n_attn, 1, c_p), lambda i: (0, 0, 0)),    # gamma*bv
                pl.BlockSpec((c_p, c_p), lambda i: (0, 0)),             # W3
                pl.BlockSpec((1, c_p), lambda i: (0, 0)),               # b3
                pl.BlockSpec((c_p, c_p), lambda i: (0, 0)),             # W4
                pl.BlockSpec((1, c_p), lambda i: (0, 0)),               # b4
            ],
            out_specs=pl.BlockSpec((tm, c_p), lambda i: (i, 0)),
        ),
        compiler_params=pltpu.CompilerParams(
            dimension_semantics=("parallel",)),
        cost_estimate=pl.CostEstimate(
            flops=flops, transcendentals=0, bytes_accessed=bytes_accessed),
    )(x_p, w1, b1, w2, b2, wv, bv, w3, b3, w4, b4)

    return out[:B, :out_c]


# ----------------------------------------------------------------------------
# Parameter init (PyTorch-style uniform init) and a pure-JAX reference that
# implements the full PyTorch math (including query/key/softmax) for checking.
# ----------------------------------------------------------------------------
def _init_linear(key, in_dim, out_dim):
    kw, kb = jax.random.split(key)
    bound = 1.0 / jnp.sqrt(jnp.float32(in_dim))
    return (jax.random.uniform(kw, (in_dim, out_dim), jnp.float32, -bound, bound),
            jax.random.uniform(kb, (out_dim,), jnp.float32, -bound, bound))


def init_embeding_block(key, in_channels, out_channels, in_size=1):
    # in_size is accepted for API parity with the PyTorch module; the forward
    # reshapes to a 1x1 feature map, so it is unused.
    del in_size
    keys = jax.random.split(key, 16)
    w1, b1 = _init_linear(keys[0], in_channels, out_channels)
    w2, b2 = _init_linear(keys[1], out_channels, out_channels)
    w3, b3 = _init_linear(keys[2], out_channels, out_channels)
    w4, b4 = _init_linear(keys[3], out_channels, out_channels)
    attention = []
    k = 4
    for _ in range(3):
        wq, bq = _init_linear(keys[k], out_channels, max(out_channels // 8, 1)); k += 1
        wk, bk = _init_linear(keys[k], out_channels, max(out_channels // 8, 1)); k += 1
        wv, bv = _init_linear(keys[k], out_channels, out_channels); k += 1
        # SAGAN initialises gamma to 0 (identity block); use a nonzero value so
        # the test actually exercises the value path.
        gamma = jax.random.normal(keys[k], (), jnp.float32) * 0.1; k += 1
        attention.append(dict(wq=wq, bq=bq, wk=wk, bk=bk, wv=wv, bv=bv, gamma=gamma))
    return dict(w1=w1, b1=b1, w2=w2, b2=b2, w3=w3, b3=b3, w4=w4, b4=b4,
                attention=attention)


def embeding_block_reference(params, x):
    """Pure-JAX reference of the PyTorch EmbedingBlock forward (full attention math)."""
    h = x @ params["w1"] + params["b1"]
    h = h @ params["w2"] + params["b2"]
    # reshape(B, C, 1, 1): the attention's spatial extent N == 1.
    for blk in params["attention"]:
        q = h @ blk["wq"] + blk["bq"]                       # (B, C//8) at the single position
        k = h @ blk["wk"] + blk["bk"]                       # (B, C//8)
        v = h @ blk["wv"] + blk["bv"]                       # (B, C)
        energy = jnp.sum(q * k, axis=-1)[:, None, None]     # (B, 1, 1)
        attn = jax.nn.softmax(energy, axis=-1)              # identically 1.0 since N == 1
        out = jnp.einsum("bcn,bmn->bcm", v[:, :, None], attn)[:, :, 0]
        h = blk["gamma"] * out + h
    h = h @ params["w3"] + params["b3"]
    h = jnp.where(h > 0, h, LRELU_SLOPE * h)
    h = h @ params["w4"] + params["b4"]
    h = jnp.where(h > 0, h, LRELU_SLOPE * h)
    return h


if __name__ == "__main__":
    key = jax.random.PRNGKey(0)
    kp, kx = jax.random.split(key)

    # Small shapes consistent with the module: (B, in_channels) -> (B, out_channels).
    B, IN_C, OUT_C = 4, 32, 128
    x = jax.random.normal(kx, (B, IN_C), jnp.float32)
    params = init_embeding_block(kp, IN_C, OUT_C, in_size=1)

    fwd = jax.jit(embeding_block_forward)
    out = fwd(params, x)
    jax.block_until_ready(out)

    ref = embeding_block_reference(params, x)
    assert out.shape == (B, OUT_C)
    max_err = float(jnp.max(jnp.abs(out - ref)))
    assert jnp.allclose(out, ref, atol=1e-3, rtol=1e-3), f"max abs err {max_err}"

    print("KERNEL_OK")
</pallas_src>

<mosaic_0001>
module attributes {stable_mosaic.version = 11 : i64} {
  func.func @_embeding_block_kernel(%arg0: i32, %arg1: memref<8x128xf32, #tpu.memory_space<vmem>>, %arg2: memref<128x128xf32, #tpu.memory_space<vmem>>, %arg3: memref<1x128xf32, #tpu.memory_space<vmem>>, %arg4: memref<128x128xf32, #tpu.memory_space<vmem>>, %arg5: memref<1x128xf32, #tpu.memory_space<vmem>>, %arg6: memref<3x128x128xf32, #tpu.memory_space<vmem>>, %arg7: memref<3x1x128xf32, #tpu.memory_space<vmem>>, %arg8: memref<128x128xf32, #tpu.memory_space<vmem>>, %arg9: memref<1x128xf32, #tpu.memory_space<vmem>>, %arg10: memref<128x128xf32, #tpu.memory_space<vmem>>, %arg11: memref<1x128xf32, #tpu.memory_space<vmem>>, %arg12: memref<8x128xf32, #tpu.memory_space<vmem>>) attributes {dimension_semantics = [#tpu.dimension_semantics<parallel>], iteration_bounds = array<i64: 1>, scalar_prefetch = 0 : i64, scratch_operands = 0 : i64, tpu.core_type = #tpu.core_type<tc>, window_params = [{transform_indices = @transform_0, window_bounds = array<i64: 8, 128>}, {pipeline_mode = #tpu.pipeline_mode<synchronous>, transform_indices = @transform_1, window_bounds = array<i64: 128, 128>}, {pipeline_mode = #tpu.pipeline_mode<synchronous>, transform_indices = @transform_2, window_bounds = array<i64: 1, 128>}, {pipeline_mode = #tpu.pipeline_mode<synchronous>, transform_indices = @transform_3, window_bounds = array<i64: 128, 128>}, {pipeline_mode = #tpu.pipeline_mode<synchronous>, transform_indices = @transform_4, window_bounds = array<i64: 1, 128>}, {pipeline_mode = #tpu.pipeline_mode<synchronous>, transform_indices = @transform_5, window_bounds = array<i64: 3, 128, 128>}, {pipeline_mode = #tpu.pipeline_mode<synchronous>, transform_indices = @transform_6, window_bounds = array<i64: 3, 1, 128>}, {pipeline_mode = #tpu.pipeline_mode<synchronous>, transform_indices = @transform_7, window_bounds = array<i64: 128, 128>}, {pipeline_mode = #tpu.pipeline_mode<synchronous>, transform_indices = @transform_8, window_bounds = array<i64: 1, 128>}, {pipeline_mode = #tpu.pipeline_mode<synchronous>, transform_indices = @transform_9, window_bounds = array<i64: 128, 128>}, {pipeline_mode = #tpu.pipeline_mode<synchronous>, transform_indices = @transform_10, window_bounds = array<i64: 1, 128>}, {transform_indices = @transform_11, window_bounds = array<i64: 8, 128>}]} {
    %c0 = arith.constant 0 : index
    %c0_0 = arith.constant 0 : index
    %0 = vector.load %arg1[%c0, %c0_0] : memref<8x128xf32, #tpu.memory_space<vmem>>, vector<8x128xf32>
    %c0_1 = arith.constant 0 : index
    %c0_2 = arith.constant 0 : index
    %1 = vector.load %arg2[%c0_1, %c0_2] : memref<128x128xf32, #tpu.memory_space<vmem>>, vector<128x128xf32>
    %cst = arith.constant dense<0.000000e+00> : vector<8x128xf32>
    %2 = tpu.matmul %0, %1, %cst {dimension_numbers = #tpu.dot_dimension_numbers<[1], [0], [0], [1], [0, 0, 1, 1], [], []>} : vector<8x128xf32>, vector<128x128xf32>, vector<8x128xf32> -> vector<8x128xf32>
    %c0_3 = arith.constant 0 : index
    %c0_4 = arith.constant 0 : index
    %3 = vector.load %arg3[%c0_3, %c0_4] : memref<1x128xf32, #tpu.memory_space<vmem>>, vector<1x128xf32>
    %4 = vector.broadcast %3 : vector<1x128xf32> to vector<8x128xf32>
    %5 = arith.addf %2, %4 : vector<8x128xf32>
    %c0_5 = arith.constant 0 : index
    %c0_6 = arith.constant 0 : index
    %6 = vector.load %arg4[%c0_5, %c0_6] : memref<128x128xf32, #tpu.memory_space<vmem>>, vector<128x128xf32>
    %cst_7 = arith.constant dense<0.000000e+00> : vector<8x128xf32>
    %7 = tpu.matmul %5, %6, %cst_7 {dimension_numbers = #tpu.dot_dimension_numbers<[1], [0], [0], [1], [0, 0, 1, 1], [], []>} : vector<8x128xf32>, vector<128x128xf32>, vector<8x128xf32> -> vector<8x128xf32>
    %c0_8 = arith.constant 0 : index
    %c0_9 = arith.constant 0 : index
    %8 = vector.load %arg5[%c0_8, %c0_9] : memref<1x128xf32, #tpu.memory_space<vmem>>, vector<1x128xf32>
    %9 = vector.broadcast %8 : vector<1x128xf32> to vector<8x128xf32>
    %10 = arith.addf %7, %9 : vector<8x128xf32>
    %c0_10 = arith.constant 0 : index
    %c0_11 = arith.constant 0 : index
    %c0_12 = arith.constant 0 : index
    %11 = vector.load %arg6[%c0_10, %c0_11, %c0_12] : memref<3x128x128xf32, #tpu.memory_space<vmem>>, vector<1x128x128xf32>
    %12 = vector.shape_cast %11 : vector<1x128x128xf32> to vector<128x128xf32>
    %cst_13 = arith.constant dense<0.000000e+00> : vector<8x128xf32>
    %13 = tpu.matmul %10, %12, %cst_13 {dimension_numbers = #tpu.dot_dimension_numbers<[1], [0], [0], [1], [0, 0, 1, 1], [], []>} : vector<8x128xf32>, vector<128x128xf32>, vector<8x128xf32> -> vector<8x128xf32>
    %c0_14 = arith.constant 0 : index
    %c0_15 = arith.constant 0 : index
    %c0_16 = arith.constant 0 : index
    %14 = vector.load %arg7[%c0_14, %c0_15, %c0_16] : memref<3x1x128xf32, #tpu.memory_space<vmem>>, vector<1x1x128xf32>
    %15 = vector.shape_cast %14 : vector<1x1x128xf32> to vector<1x128xf32>
    %16 = vector.broadcast %15 : vector<1x128xf32> to vector<8x128xf32>
    %17 = arith.addf %13, %16 : vector<8x128xf32>
    %18 = arith.addf %17, %10 : vector<8x128xf32>
    %c1 = arith.constant 1 : index
    %c0_17 = arith.constant 0 : index
    %c0_18 = arith.constant 0 : index
    %19 = vector.load %arg6[%c1, %c0_17, %c0_18] : memref<3x128x128xf32, #tpu.memory_space<vmem>>, vector<1x128x128xf32>
    %20 = vector.shape_cast %19 : vector<1x128x128xf32> to vector<128x128xf32>
    %cst_19 = arith.constant dense<0.000000e+00> : vector<8x128xf32>
    %21 = tpu.matmul %18, %20, %cst_19 {dimension_numbers = #tpu.dot_dimension_numbers<[1], [0], [0], [1], [0, 0, 1, 1], [], []>} : vector<8x128xf32>, vector<128x128xf32>, vector<8x128xf32> -> vector<8x128xf32>
    %c1_20 = arith.constant 1 : index
    %c0_21 = arith.constant 0 : index
    %c0_22 = arith.constant 0 : index
    %22 = vector.load %arg7[%c1_20, %c0_21, %c0_22] : memref<3x1x128xf32, #tpu.memory_space<vmem>>, vector<1x1x128xf32>
    %23 = vector.shape_cast %22 : vector<1x1x128xf32> to vector<1x128xf32>
    %24 = vector.broadcast %23 : vector<1x128xf32> to vector<8x128xf32>
    %25 = arith.addf %21, %24 : vector<8x128xf32>
    %26 = arith.addf %25, %18 : vector<8x128xf32>
    %c2 = arith.constant 2 : index
    %c0_23 = arith.constant 0 : index
    %c0_24 = arith.constant 0 : index
    %27 = vector.load %arg6[%c2, %c0_23, %c0_24] : memref<3x128x128xf32, #tpu.memory_space<vmem>>, vector<1x128x128xf32>
    %28 = vector.shape_cast %27 : vector<1x128x128xf32> to vector<128x128xf32>
    %cst_25 = arith.constant dense<0.000000e+00> : vector<8x128xf32>
    %29 = tpu.matmul %26, %28, %cst_25 {dimension_numbers = #tpu.dot_dimension_numbers<[1], [0], [0], [1], [0, 0, 1, 1], [], []>} : vector<8x128xf32>, vector<128x128xf32>, vector<8x128xf32> -> vector<8x128xf32>
    %c2_26 = arith.constant 2 : index
    %c0_27 = arith.constant 0 : index
    %c0_28 = arith.constant 0 : index
    %30 = vector.load %arg7[%c2_26, %c0_27, %c0_28] : memref<3x1x128xf32, #tpu.memory_space<vmem>>, vector<1x1x128xf32>
    %31 = vector.shape_cast %30 : vector<1x1x128xf32> to vector<1x128xf32>
    %32 = vector.broadcast %31 : vector<1x128xf32> to vector<8x128xf32>
    %33 = arith.addf %29, %32 : vector<8x128xf32>
    %34 = arith.addf %33, %26 : vector<8x128xf32>
    %c0_29 = arith.constant 0 : index
    %c0_30 = arith.constant 0 : index
    %35 = vector.load %arg8[%c0_29, %c0_30] : memref<128x128xf32, #tpu.memory_space<vmem>>, vector<128x128xf32>
    %cst_31 = arith.constant dense<0.000000e+00> : vector<8x128xf32>
    %36 = tpu.matmul %34, %35, %cst_31 {dimension_numbers = #tpu.dot_dimension_numbers<[1], [0], [0], [1], [0, 0, 1, 1], [], []>} : vector<8x128xf32>, vector<128x128xf32>, vector<8x128xf32> -> vector<8x128xf32>
    %c0_32 = arith.constant 0 : index
    %c0_33 = arith.constant 0 : index
    %37 = vector.load %arg9[%c0_32, %c0_33] : memref<1x128xf32, #tpu.memory_space<vmem>>, vector<1x128xf32>
    %38 = vector.broadcast %37 : vector<1x128xf32> to vector<8x128xf32>
    %39 = arith.addf %36, %38 : vector<8x128xf32>
    %cst_34 = arith.constant 0.000000e+00 : f32
    %40 = vector.broadcast %cst_34 : f32 to vector<8x128xf32>
    %41 = arith.cmpf ogt, %39, %40 : vector<8x128xf32>
    %cst_35 = arith.constant 2.000000e-01 : f32
    %42 = vector.broadcast %cst_35 : f32 to vector<8x128xf32>
    %43 = arith.mulf %42, %39 : vector<8x128xf32>
    %44 = arith.select %41, %39, %43 : vector<8x128xi1>, vector<8x128xf32>
    %c0_36 = arith.constant 0 : index
    %c0_37 = arith.constant 0 : index
    %45 = vector.load %arg10[%c0_36, %c0_37] : memref<128x128xf32, #tpu.memory_space<vmem>>, vector<128x128xf32>
    %cst_38 = arith.constant dense<0.000000e+00> : vector<8x128xf32>
    %46 = tpu.matmul %44, %45, %cst_38 {dimension_numbers = #tpu.dot_dimension_numbers<[1], [0], [0], [1], [0, 0, 1, 1], [], []>} : vector<8x128xf32>, vector<128x128xf32>, vector<8x128xf32> -> vector<8x128xf32>
    %c0_39 = arith.constant 0 : index
    %c0_40 = arith.constant 0 : index
    %47 = vector.load %arg11[%c0_39, %c0_40] : memref<1x128xf32, #tpu.memory_space<vmem>>, vector<1x128xf32>
    %48 = vector.broadcast %47 : vector<1x128xf32> to vector<8x128xf32>
    %49 = arith.addf %46, %48 : vector<8x128xf32>
    %cst_41 = arith.constant 0.000000e+00 : f32
    %50 = vector.broadcast %cst_41 : f32 to vector<8x128xf32>
    %51 = arith.cmpf ogt, %49, %50 : vector<8x128xf32>
    %cst_42 = arith.constant 2.000000e-01 : f32
    %52 = vector.broadcast %cst_42 : f32 to vector<8x128xf32>
    %53 = arith.mulf %52, %49 : vector<8x128xf32>
    %54 = arith.select %51, %49, %53 : vector<8x128xi1>, vector<8x128xf32>
    %c0_43 = arith.constant 0 : index
    %c0_44 = arith.constant 0 : index
    %55 = vector.load %arg12[%c0_43, %c0_44] : memref<8x128xf32, #tpu.memory_space<vmem>>, vector<8x128xf32>
    tpu.vector_store %arg12[%c0_43, %c0_44], %54 {strides = array<i32>} : memref<8x128xf32, #tpu.memory_space<vmem>>, vector<8x128xf32>,
    return
  }
  func.func @transform_0(%arg0: i32) -> (i32, i32) {
    %c0_i32 = arith.constant 0 : i32
    %c0_i32_0 = arith.constant 0 : i32
    return %arg0, %c0_i32 : i32, i32
  }
  func.func @transform_1(%arg0: i32) -> (i32, i32) {
    %c0_i32 = arith.constant 0 : i32
    %c0_i32_0 = arith.constant 0 : i32
    %c0_i32_1 = arith.constant 0 : i32
    return %c0_i32, %c0_i32_0 : i32, i32
  }
  func.func @transform_2(%arg0: i32) -> (i32, i32) {
    %c0_i32 = arith.constant 0 : i32
    %c0_i32_0 = arith.constant 0 : i32
    %c0_i32_1 = arith.constant 0 : i32
    return %c0_i32, %c0_i32_0 : i32, i32
  }
  func.func @transform_3(%arg0: i32) -> (i32, i32) {
    %c0_i32 = arith.constant 0 : i32
    %c0_i32_0 = arith.constant 0 : i32
    %c0_i32_1 = arith.constant 0 : i32
    return %c0_i32, %c0_i32_0 : i32, i32
  }
  func.func @transform_4(%arg0: i32) -> (i32, i32) {
    %c0_i32 = arith.constant 0 : i32
    %c0_i32_0 = arith.constant 0 : i32
    %c0_i32_1 = arith.constant 0 : i32
    return %c0_i32, %c0_i32_0 : i32, i32
  }
  func.func @transform_5(%arg0: i32) -> (i32, i32, i32) {
    %c0_i32 = arith.constant 0 : i32
    %c0_i32_0 = arith.constant 0 : i32
    %c0_i32_1 = arith.constant 0 : i32
    %c0_i32_2 = arith.constant 0 : i32
    return %c0_i32, %c0_i32_0, %c0_i32_1 : i32, i32, i32
  }
  func.func @transform_6(%arg0: i32) -> (i32, i32, i32) {
    %c0_i32 = arith.constant 0 : i32
    %c0_i32_0 = arith.constant 0 : i32
    %c0_i32_1 = arith.constant 0 : i32
    %c0_i32_2 = arith.constant 0 : i32
    return %c0_i32, %c0_i32_0, %c0_i32_1 : i32, i32, i32
  }
  func.func @transform_7(%arg0: i32) -> (i32, i32) {
    %c0_i32 = arith.constant 0 : i32
    %c0_i32_0 = arith.constant 0 : i32
    %c0_i32_1 = arith.constant 0 : i32
    return %c0_i32, %c0_i32_0 : i32, i32
  }
  func.func @transform_8(%arg0: i32) -> (i32, i32) {
    %c0_i32 = arith.constant 0 : i32
    %c0_i32_0 = arith.constant 0 : i32
    %c0_i32_1 = arith.constant 0 : i32
    return %c0_i32, %c0_i32_0 : i32, i32
  }
  func.func @transform_9(%arg0: i32) -> (i32, i32) {
    %c0_i32 = arith.constant 0 : i32
    %c0_i32_0 = arith.constant 0 : i32
    %c0_i32_1 = arith.constant 0 : i32
    return %c0_i32, %c0_i32_0 : i32, i32
  }
  func.func @transform_10(%arg0: i32) -> (i32, i32) {
    %c0_i32 = arith.constant 0 : i32
    %c0_i32_0 = arith.constant 0 : i32
    %c0_i32_1 = arith.constant 0 : i32
    return %c0_i32, %c0_i32_0 : i32, i32
  }
  func.func @transform_11(%arg0: i32) -> (i32, i32) {
    %c0_i32 = arith.constant 0 : i32
    %c0_i32_0 = arith.constant 0 : i32
    return %arg0, %c0_i32 : i32, i32
  }
}

</mosaic_0001>

<llo_original>
// kernel: embeding_block_forward.1
$region0: #{embeding_block_forward.1}
  #allocation0 [shape = 'u32[]', space=smem, size = 0x4, offset = 0x4, fixed_abs, tag = 'smem constant byte address 0x4 - core index']
  #allocation1 [shape = 'u32[144,128]{1,0:T(1,128)}', space=vmem, size = 0x12000, scoped, tag = 'internal scratch']
  %s0 = inlined_call_operand.vmem [shape: f32[8,128], index: 0, kind: input, shape index: {}]
  %s1 = inlined_call_operand.vmem [shape: f32[128,128], index: 1, kind: input, shape index: {}]
  %s2 = inlined_call_operand.vmem [shape: f32[1,128], index: 2, kind: input, shape index: {}]
  %s3 = inlined_call_operand.vmem [shape: f32[128,128], index: 3, kind: input, shape index: {}]
  %s4 = inlined_call_operand.vmem [shape: f32[1,128], index: 4, kind: input, shape index: {}]
  %s5 = inlined_call_operand.vmem [shape: f32[3,128,128], index: 5, kind: input, shape index: {}]
  %s6 = inlined_call_operand.vmem [shape: f32[3,1,128], index: 6, kind: input, shape index: {}]
  %s7 = inlined_call_operand.vmem [shape: f32[128,128], index: 7, kind: input, shape index: {}]
  %s8 = inlined_call_operand.vmem [shape: f32[1,128], index: 8, kind: input, shape index: {}]
  %s9 = inlined_call_operand.vmem [shape: f32[128,128], index: 9, kind: input, shape index: {}]
  %s10 = inlined_call_operand.vmem [shape: f32[1,128], index: 10, kind: input, shape index: {}]
  %s11 = inlined_call_operand.vmem [shape: f32[8,128], index: 11, kind: output, shape index: {}]
  %s12 = sld [smem:[#allocation0]]
  $region54: #{embeding_block_forward.1} parent=0
    _
  %s14 = ssub.s32 1, %s12
  %s15 = scalar_select 0, %s14, %s12
  // Predicated region
  $region2: #{embeding_block_forward.1} parent=0 // pred_check
    _
  $region3: #{embeding_block_forward.1} parent=0 // pred_check_branch
    %17 = sbr.rel (0) target = $region5
  $region4: #{embeding_block_forward.1} parent=0 // pred_region
    _
  $region5: #{embeding_block_forward.1} parent=0 // pred_fallthru
    _
  // Predicated region
  $region6: #{embeding_block_forward.1} parent=0 // pred_check
    _
  $region7: #{embeding_block_forward.1} parent=0 // pred_check_branch
    %19 = sbr.rel (0) target = $region9
  $region8: #{embeding_block_forward.1} parent=0 // pred_region
    _
  $region9: #{embeding_block_forward.1} parent=0 // pred_fallthru
    _
  // Predicated region
  $region10: #{embeding_block_forward.1} parent=0 // pred_check
    _
  $region11: #{embeding_block_forward.1} parent=0 // pred_check_branch
    %21 = sbr.rel (0) target = $region13
  $region12: #{embeding_block_forward.1} parent=0 // pred_region
    _
  $region13: #{embeding_block_forward.1} parent=0 // pred_fallthru
    _
  // Predicated region
  $region14: #{embeding_block_forward.1} parent=0 // pred_check
    _
  $region15: #{embeding_block_forward.1} parent=0 // pred_check_branch
    %23 = sbr.rel (0) target = $region17
  $region16: #{embeding_block_forward.1} parent=0 // pred_region
    _
  $region17: #{embeding_block_forward.1} parent=0 // pred_fallthru
    _
  // Predicated region
  $region18: #{embeding_block_forward.1} parent=0 // pred_check
    _
  $region19: #{embeding_block_forward.1} parent=0 // pred_check_branch
    %25 = sbr.rel (0) target = $region21
  $region20: #{embeding_block_forward.1} parent=0 // pred_region
    _
  $region21: #{embeding_block_forward.1} parent=0 // pred_fallthru
    _
  // Predicated region
  $region22: #{embeding_block_forward.1} parent=0 // pred_check
    _
  $region23: #{embeding_block_forward.1} parent=0 // pred_check_branch
    %27 = sbr.rel (0) target = $region25
  $region24: #{embeding_block_forward.1} parent=0 // pred_region
    _
  $region25: #{embeding_block_forward.1} parent=0 // pred_fallthru
    _
  // Predicated region
  $region26: #{embeding_block_forward.1} parent=0 // pred_check
    _
  $region27: #{embeding_block_forward.1} parent=0 // pred_check_branch
    %29 = sbr.rel (0) target = $region29
  $region28: #{embeding_block_forward.1} parent=0 // pred_region
    _
  $region29: #{embeding_block_forward.1} parent=0 // pred_fallthru
    _
  // Predicated region
  $region30: #{embeding_block_forward.1} parent=0 // pred_check
    _
  $region31: #{embeding_block_forward.1} parent=0 // pred_check_branch
    %31 = sbr.rel (0) target = $region33
  $region32: #{embeding_block_forward.1} parent=0 // pred_region
    _
  $region33: #{embeding_block_forward.1} parent=0 // pred_fallthru
    _
  // Predicated region
  $region34: #{embeding_block_forward.1} parent=0 // pred_check
    _
  $region35: #{embeding_block_forward.1} parent=0 // pred_check_branch
    %33 = sbr.rel (0) target = $region37
  $region36: #{embeding_block_forward.1} parent=0 // pred_region
    _
  $region37: #{embeding_block_forward.1} parent=0 // pred_fallthru
    _
  // Predicated region
  $region38: #{embeding_block_forward.1} parent=0 // pred_check
    _
  $region39: #{embeding_block_forward.1} parent=0 // pred_check_branch
    %35 = sbr.rel (0) target = $region41
  $region40: #{embeding_block_forward.1} parent=0 // pred_region
    _
  $region41: #{embeding_block_forward.1} parent=0 // pred_fallthru
    _
  // Predicated region
  $region42: #{embeding_block_forward.1} parent=0 // pred_check
    _
  $region43: #{embeding_block_forward.1} parent=0 // pred_check_branch
    %37 = sbr.rel (0) target = $region45
  $region44: #{embeding_block_forward.1} parent=0 // pred_region
    _
  $region45: #{embeding_block_forward.1} parent=0 // pred_fallthru
    _
  %v38 = vld [vmem:[%s0] sm:$0xff]
  %v39 = vld [vmem:[%s1] sm:$0xff]
  %v40 = vld [vmem:[%s1 + $0x8] sm:$0xff]
  %v41 = vld [vmem:[%s1 + $0x10] sm:$0xff]
  %v42 = vld [vmem:[%s1 + $0x18] sm:$0xff]
  %v43 = vld [vmem:[%s1 + $0x20] sm:$0xff]
  %v44 = vld [vmem:[%s1 + $0x28] sm:$0xff]
  %v45 = vld [vmem:[%s1 + $0x30] sm:$0xff]
  %v46 = vld [vmem:[%s1 + $0x38] sm:$0xff]
  %v47 = vld [vmem:[%s1 + $0x40] sm:$0xff]
  %v48 = vld [vmem:[%s1 + $0x48] sm:$0xff]
  %v49 = vld [vmem:[%s1 + $0x50] sm:$0xff]
  %v50 = vld [vmem:[%s1 + $0x58] sm:$0xff]
  %v51 = vld [vmem:[%s1 + $0x60] sm:$0xff]
  %v52 = vld [vmem:[%s1 + $0x68] sm:$0xff]
  %v53 = vld [vmem:[%s1 + $0x70] sm:$0xff]
  %v54 = vld [vmem:[%s1 + $0x78] sm:$0xff]
  %v55 = vld [vmem:[%s2] sm:$0x1]
  %v57 = vlaneseq
  %v58 = vshrl.u32 %v57, 7
  %v59 = vsub.s32 0, %v58
  %v60 = vrot.slane %v55, %v59
  %62 = vmatprep.subr.mxu0 0.0
  %63 = vmatpush1.msra.mxu0 %v39
  %64 = vmatprep.subr.mxu0 0.0
  %65 = vmatpush1.msra.mxu0 %v40
  %66 = vmatprep.subr.mxu0 0.0
  %67 = vmatpush1.msra.mxu0 %v41
  %68 = vmatprep.subr.mxu0 0.0
  %69 = vmatpush1.msra.mxu0 %v42
  %70 = vmatprep.subr.mxu0 0.0
  %71 = vmatpush1.msra.mxu0 %v43
  %72 = vmatprep.subr.mxu0 0.0
  %73 = vmatpush1.msra.mxu0 %v44
  %74 = vmatprep.subr.mxu0 0.0
  %75 = vmatpush1.msra.mxu0 %v45
  %76 = vmatprep.subr.mxu0 0.0
  %77 = vmatpush1.msra.mxu0 %v46
  %78 = vmatprep.subr.mxu0 0.0
  %79 = vmatpush1.msra.mxu0 %v47
  %80 = vmatprep.subr.mxu0 0.0
  %81 = vmatpush1.msra.mxu0 %v48
  %82 = vmatprep.subr.mxu0 0.0
  %83 = vmatpush1.msra.mxu0 %v49
  %84 = vmatprep.subr.mxu0 0.0
  %85 = vmatpush1.msra.mxu0 %v50
  %86 = vmatprep.subr.mxu0 0.0
  %87 = vmatpush1.msra.mxu0 %v51
  %88 = vmatprep.subr.mxu0 0.0
  %89 = vmatpush1.msra.mxu0 %v52
  %90 = vmatprep.subr.mxu0 0.0
  %91 = vmatpush1.msra.mxu0 %v53
  %92 = vmatprep.subr.mxu0 0.0
  %93 = vmatpush1.msra.mxu0 %v54
  %94 = vmatprep.subr.mxu0 0.0
  %95 = vmatpush1.msra.mxu0 0.0
  %96 = vmatprep.subr.mxu0 0.0
  %97 = vmatpush1.msra.mxu0 0.0
  %98 = vmatprep.subr.mxu0 0.0
  %99 = vmatpush1.msra.mxu0 0.0
  %100 = vmatprep.subr.mxu0 0.0
  %101 = vmatpush1.msra.mxu0 0.0
  %102 = vmatprep.subr.mxu0 0.0
  %103 = vmatpush1.msra.mxu0 0.0
  %104 = vmatprep.subr.mxu0 0.0
  %105 = vmatpush1.msra.mxu0 0.0
  %106 = vmatprep.subr.mxu0 0.0
  %107 = vmatpush1.msra.mxu0 0.0
  %108 = vmatprep.subr.mxu0 0.0
  %109 = vmatpush1.msra.mxu0 0.0
  %110 = vmatprep.subr.mxu0 0.0
  %111 = vmatpush1.msra.mxu0 0.0
  %112 = vmatprep.subr.mxu0 0.0
  %113 = vmatpush1.msra.mxu0 0.0
  %114 = vmatprep.subr.mxu0 0.0
  %115 = vmatpush1.msra.mxu0 0.0
  %116 = vmatprep.subr.mxu0 0.0
  %117 = vmatpush1.msra.mxu0 0.0
  %118 = vmatprep.subr.mxu0 0.0
  %119 = vmatpush1.msra.mxu0 0.0
  %120 = vmatprep.subr.mxu0 0.0
  %121 = vmatpush1.msra.mxu0 0.0
  %122 = vmatprep.subr.mxu0 0.0
  %123 = vmatpush1.msra.mxu0 0.0
  %124 = vmatprep.subr.mxu0 0.0
  %125 = vmatpush1.msra.mxu0 0.0
  %126 = vmatprep.mubr.f32.mxu0 0.0
  %127 = vmatmul.mubr.f32.gmra.mrb[0].mxu0 %v38
  %v128 = vpop.f32.mrb[0].mxu0
  %v129 = vadd.f32 %v60, %v128
  %v130 = vpop.f32.mrb[0].mxu0
  %131 = vdwg.mxu0
  %v132 = vld [vmem:[%s3] sm:$0xff]
  %v133 = vld [vmem:[%s3 + $0x8] sm:$0xff]
  %v134 = vld [vmem:[%s3 + $0x10] sm:$0xff]
  %v135 = vld [vmem:[%s3 + $0x18] sm:$0xff]
  %v136 = vld [vmem:[%s3 + $0x20] sm:$0xff]
  %v137 = vld [vmem:[%s3 + $0x28] sm:$0xff]
  %v138 = vld [vmem:[%s3 + $0x30] sm:$0xff]
  %v139 = vld [vmem:[%s3 + $0x38] sm:$0xff]
  %v140 = vld [vmem:[%s3 + $0x40] sm:$0xff]
  %v141 = vld [vmem:[%s3 + $0x48] sm:$0xff]
  %v142 = vld [vmem:[%s3 + $0x50] sm:$0xff]
  %v143 = vld [vmem:[%s3 + $0x58] sm:$0xff]
  %v144 = vld [vmem:[%s3 + $0x60] sm:$0xff]
  %v145 = vld [vmem:[%s3 + $0x68] sm:$0xff]
  %v146 = vld [vmem:[%s3 + $0x70] sm:$0xff]
  %v147 = vld [vmem:[%s3 + $0x78] sm:$0xff]
  %v148 = vld [vmem:[%s4] sm:$0x1]
  %v150 = vlaneseq
  %v151 = vshrl.u32 %v150, 7
  %v152 = vsub.s32 0, %v151
  %v153 = vrot.slane %v148, %v152
  %155 = vmatprep.subr.mxu0 0.0
  %156 = vmatpush1.msra.mxu0 %v132
  %157 = vmatprep.subr.mxu0 0.0
  %158 = vmatpush1.msra.mxu0 %v133
  %159 = vmatprep.subr.mxu0 0.0
  %160 = vmatpush1.msra.mxu0 %v134
  %161 = vmatprep.subr.mxu0 0.0
  %162 = vmatpush1.msra.mxu0 %v135
  %163 = vmatprep.subr.mxu0 0.0
  %164 = vmatpush1.msra.mxu0 %v136
  %165 = vmatprep.subr.mxu0 0.0
  %166 = vmatpush1.msra.mxu0 %v137
  %167 = vmatprep.subr.mxu0 0.0
  %168 = vmatpush1.msra.mxu0 %v138
  %169 = vmatprep.subr.mxu0 0.0
  %170 = vmatpush1.msra.mxu0 %v139
  %171 = vmatprep.subr.mxu0 0.0
  %172 = vmatpush1.msra.mxu0 %v140
  %173 = vmatprep.subr.mxu0 0.0
  %174 = vmatpush1.msra.mxu0 %v141
  %175 = vmatprep.subr.mxu0 0.0
  %176 = vmatpush1.msra.mxu0 %v142
  %177 = vmatprep.subr.mxu0 0.0
  %178 = vmatpush1.msra.mxu0 %v143
  %179 = vmatprep.subr.mxu0 0.0
  %180 = vmatpush1.msra.mxu0 %v144
  %181 = vmatprep.subr.mxu0 0.0
  %182 = vmatpush1.msra.mxu0 %v145
  %183 = vmatprep.subr.mxu0 0.0
  %184 = vmatpush1.msra.mxu0 %v146
  %185 = vmatprep.subr.mxu0 0.0
  %186 = vmatpush1.msra.mxu0 %v147
  %187 = vmatprep.subr.mxu0 0.0
  %188 = vmatpush1.msra.mxu0 0.0
  %189 = vmatprep.subr.mxu0 0.0
  %190 = vmatpush1.msra.mxu0 0.0
  %191 = vmatprep.subr.mxu0 0.0
  %192 = vmatpush1.msra.mxu0 0.0
  %193 = vmatprep.subr.mxu0 0.0
  %194 = vmatpush1.msra.mxu0 0.0
  %195 = vmatprep.subr.mxu0 0.0
  %196 = vmatpush1.msra.mxu0 0.0
  %197 = vmatprep.subr.mxu0 0.0
  %198 = vmatpush1.msra.mxu0 0.0
  %199 = vmatprep.subr.mxu0 0.0
  %200 = vmatpush1.msra.mxu0 0.0
  %201 = vmatprep.subr.mxu0 0.0
  %202 = vmatpush1.msra.mxu0 0.0
  %203 = vmatprep.subr.mxu0 0.0
  %204 = vmatpush1.msra.mxu0 0.0
  %205 = vmatprep.subr.mxu0 0.0
  %206 = vmatpush1.msra.mxu0 0.0
  %207 = vmatprep.subr.mxu0 0.0
  %208 = vmatpush1.msra.mxu0 0.0
  %209 = vmatprep.subr.mxu0 0.0
  %210 = vmatpush1.msra.mxu0 0.0
  %211 = vmatprep.subr.mxu0 0.0
  %212 = vmatpush1.msra.mxu0 0.0
  %213 = vmatprep.subr.mxu0 0.0
  %214 = vmatpush1.msra.mxu0 0.0
  %215 = vmatprep.subr.mxu0 0.0
  %216 = vmatpush1.msra.mxu0 0.0
  %217 = vmatprep.subr.mxu0 0.0
  %218 = vmatpush1.msra.mxu0 0.0
  %219 = vmatprep.mubr.f32.mxu0 0.0
  %220 = vmatmul.mubr.f32.gmra.mrb[0].mxu0 %v129
  %v221 = vpop.f32.mrb[0].mxu0
  %v222 = vadd.f32 %v153, %v221
  %v223 = vpop.f32.mrb[0].mxu0
  %224 = vdwg.mxu0
  %v225 = vld [vmem:[%s5] sm:$0xff]
  %v226 = vld [vmem:[%s5 + $0x8] sm:$0xff]
  %v227 = vld [vmem:[%s5 + $0x10] sm:$0xff]
  %v228 = vld [vmem:[%s5 + $0x18] sm:$0xff]
  %v229 = vld [vmem:[%s5 + $0x20] sm:$0xff]
  %v230 = vld [vmem:[%s5 + $0x28] sm:$0xff]
  %v231 = vld [vmem:[%s5 + $0x30] sm:$0xff]
  %v232 = vld [vmem:[%s5 + $0x38] sm:$0xff]
  %v233 = vld [vmem:[%s5 + $0x40] sm:$0xff]
  %v234 = vld [vmem:[%s5 + $0x48] sm:$0xff]
  %v235 = vld [vmem:[%s5 + $0x50] sm:$0xff]
  %v236 = vld [vmem:[%s5 + $0x58] sm:$0xff]
  %v237 = vld [vmem:[%s5 + $0x60] sm:$0xff]
  %v238 = vld [vmem:[%s5 + $0x68] sm:$0xff]
  %v239 = vld [vmem:[%s5 + $0x70] sm:$0xff]
  %v240 = vld [vmem:[%s5 + $0x78] sm:$0xff]
  %v241 = vld [vmem:[%s6] sm:$0x1]
  %v243 = vlaneseq
  %v244 = vshrl.u32 %v243, 7
  %v245 = vsub.s32 0, %v244
  %v246 = vrot.slane %v241, %v245
  %248 = vmatprep.subr.mxu0 0.0
  %249 = vmatpush1.msra.mxu0 %v225
  %250 = vmatprep.subr.mxu0 0.0
  %251 = vmatpush1.msra.mxu0 %v226
  %252 = vmatprep.subr.mxu0 0.0
  %253 = vmatpush1.msra.mxu0 %v227
  %254 = vmatprep.subr.mxu0 0.0
  %255 = vmatpush1.msra.mxu0 %v228
  %256 = vmatprep.subr.mxu0 0.0
  %257 = vmatpush1.msra.mxu0 %v229
  %258 = vmatprep.subr.mxu0 0.0
  %259 = vmatpush1.msra.mxu0 %v230
  %260 = vmatprep.subr.mxu0 0.0
  %261 = vmatpush1.msra.mxu0 %v231
  %262 = vmatprep.subr.mxu0 0.0
  %263 = vmatpush1.msra.mxu0 %v232
  %264 = vmatprep.subr.mxu0 0.0
  %265 = vmatpush1.msra.mxu0 %v233
  %266 = vmatprep.subr.mxu0 0.0
  %267 = vmatpush1.msra.mxu0 %v234
  %268 = vmatprep.subr.mxu0 0.0
  %269 = vmatpush1.msra.mxu0 %v235
  %270 = vmatprep.subr.mxu0 0.0
  %271 = vmatpush1.msra.mxu0 %v236
  %272 = vmatprep.subr.mxu0 0.0
  %273 = vmatpush1.msra.mxu0 %v237
  %274 = vmatprep.subr.mxu0 0.0
  %275 = vmatpush1.msra.mxu0 %v238
  %276 = vmatprep.subr.mxu0 0.0
  %277 = vmatpush1.msra.mxu0 %v239
  %278 = vmatprep.subr.mxu0 0.0
  %279 = vmatpush1.msra.mxu0 %v240
  %280 = vmatprep.subr.mxu0 0.0
  %281 = vmatpush1.msra.mxu0 0.0
  %282 = vmatprep.subr.mxu0 0.0
  %283 = vmatpush1.msra.mxu0 0.0
  %284 = vmatprep.subr.mxu0 0.0
  %285 = vmatpush1.msra.mxu0 0.0
  %286 = vmatprep.subr.mxu0 0.0
  %287 = vmatpush1.msra.mxu0 0.0
  %288 = vmatprep.subr.mxu0 0.0
  %289 = vmatpush1.msra.mxu0 0.0
  %290 = vmatprep.subr.mxu0 0.0
  %291 = vmatpush1.msra.mxu0 0.0
  %292 = vmatprep.subr.mxu0 0.0
  %293 = vmatpush1.msra.mxu0 0.0
  %294 = vmatprep.subr.mxu0 0.0
  %295 = vmatpush1.msra.mxu0 0.0
  %296 = vmatprep.subr.mxu0 0.0
  %297 = vmatpush1.msra.mxu0 0.0
  %298 = vmatprep.subr.mxu0 0.0
  %299 = vmatpush1.msra.mxu0 0.0
  %300 = vmatprep.subr.mxu0 0.0
  %301 = vmatpush1.msra.mxu0 0.0
  %302 = vmatprep.subr.mxu0 0.0
  %303 = vmatpush1.msra.mxu0 0.0
  %304 = vmatprep.subr.mxu0 0.0
  %305 = vmatpush1.msra.mxu0 0.0
  %306 = vmatprep.subr.mxu0 0.0
  %307 = vmatpush1.msra.mxu0 0.0
  %308 = vmatprep.subr.mxu0 0.0
  %309 = vmatpush1.msra.mxu0 0.0
  %310 = vmatprep.subr.mxu0 0.0
  %311 = vmatpush1.msra.mxu0 0.0
  %312 = vmatprep.mubr.f32.mxu0 0.0
  %313 = vmatmul.mubr.f32.gmra.mrb[0].mxu0 %v222
  %v314 = vpop.f32.mrb[0].mxu0
  %v315 = vadd.f32 %v246, %v314
  %v316 = vpop.f32.mrb[0].mxu0
  %317 = vdwg.mxu0
  %v318 = vadd.f32 %v315, %v222
  %s319 = scalar_lea.vmem %s5, 128
  %v320 = vld [vmem:[%s319] sm:$0xff]
  %v321 = vld [vmem:[%s319 + $0x8] sm:$0xff]
  %v322 = vld [vmem:[%s319 + $0x10] sm:$0xff]
  %v323 = vld [vmem:[%s319 + $0x18] sm:$0xff]
  %v324 = vld [vmem:[%s319 + $0x20] sm:$0xff]
  %v325 = vld [vmem:[%s319 + $0x28] sm:$0xff]
  %v326 = vld [vmem:[%s319 + $0x30] sm:$0xff]
  %v327 = vld [vmem:[%s319 + $0x38] sm:$0xff]
  %v328 = vld [vmem:[%s319 + $0x40] sm:$0xff]
  %v329 = vld [vmem:[%s319 + $0x48] sm:$0xff]
  %v330 = vld [vmem:[%s319 + $0x50] sm:$0xff]
  %v331 = vld [vmem:[%s319 + $0x58] sm:$0xff]
  %v332 = vld [vmem:[%s319 + $0x60] sm:$0xff]
  %v333 = vld [vmem:[%s319 + $0x68] sm:$0xff]
  %v334 = vld [vmem:[%s319 + $0x70] sm:$0xff]
  %v335 = vld [vmem:[%s319 + $0x78] sm:$0xff]
  %s336 = scalar_lea.vmem %s6, 1
  %v337 = vld [vmem:[%s336] sm:$0x1]
  %v339 = vlaneseq
  %v340 = vshrl.u32 %v339, 7
  %v341 = vsub.s32 0, %v340
  %v342 = vrot.slane %v337, %v341
  %344 = vmatprep.subr.mxu0 0.0
  %345 = vmatpush1.msra.mxu0 %v320
  %346 = vmatprep.subr.mxu0 0.0
  %347 = vmatpush1.msra.mxu0 %v321
  %348 = vmatprep.subr.mxu0 0.0
  %349 = vmatpush1.msra.mxu0 %v322
  %350 = vmatprep.subr.mxu0 0.0
  %351 = vmatpush1.msra.mxu0 %v323
  %352 = vmatprep.subr.mxu0 0.0
  %353 = vmatpush1.msra.mxu0 %v324
  %354 = vmatprep.subr.mxu0 0.0
  %355 = vmatpush1.msra.mxu0 %v325
  %356 = vmatprep.subr.mxu0 0.0
  %357 = vmatpush1.msra.mxu0 %v326
  %358 = vmatprep.subr.mxu0 0.0
  %359 = vmatpush1.msra.mxu0 %v327
  %360 = vmatprep.subr.mxu0 0.0
  %361 = vmatpush1.msra.mxu0 %v328
  %362 = vmatprep.subr.mxu0 0.0
  %363 = vmatpush1.msra.mxu0 %v329
  %364 = vmatprep.subr.mxu0 0.0
  %365 = vmatpush1.msra.mxu0 %v330
  %366 = vmatprep.subr.mxu0 0.0
  %367 = vmatpush1.msra.mxu0 %v331
  %368 = vmatprep.subr.mxu0 0.0
  %369 = vmatpush1.msra.mxu0 %v332
  %370 = vmatprep.subr.mxu0 0.0
  %371 = vmatpush1.msra.mxu0 %v333
  %372 = vmatprep.subr.mxu0 0.0
  %373 = vmatpush1.msra.mxu0 %v334
  %374 = vmatprep.subr.mxu0 0.0
  %375 = vmatpush1.msra.mxu0 %v335
  %376 = vmatprep.subr.mxu0 0.0
  %377 = vmatpush1.msra.mxu0 0.0
  %378 = vmatprep.subr.mxu0 0.0
  %379 = vmatpush1.msra.mxu0 0.0
  %380 = vmatprep.subr.mxu0 0.0
  %381 = vmatpush1.msra.mxu0 0.0
  %382 = vmatprep.subr.mxu0 0.0
  %383 = vmatpush1.msra.mxu0 0.0
  %384 = vmatprep.subr.mxu0 0.0
  %385 = vmatpush1.msra.mxu0 0.0
  %386 = vmatprep.subr.mxu0 0.0
  %387 = vmatpush1.msra.mxu0 0.0
  %388 = vmatprep.subr.mxu0 0.0
  %389 = vmatpush1.msra.mxu0 0.0
  %390 = vmatprep.subr.mxu0 0.0
  %391 = vmatpush1.msra.mxu0 0.0
  %392 = vmatprep.subr.mxu0 0.0
  %393 = vmatpush1.msra.mxu0 0.0
  %394 = vmatprep.subr.mxu0 0.0
  %395 = vmatpush1.msra.mxu0 0.0
  %396 = vmatprep.subr.mxu0 0.0
  %397 = vmatpush1.msra.mxu0 0.0
  %398 = vmatprep.subr.mxu0 0.0
  %399 = vmatpush1.msra.mxu0 0.0
  %400 = vmatprep.subr.mxu0 0.0
  %401 = vmatpush1.msra.mxu0 0.0
  %402 = vmatprep.subr.mxu0 0.0
  %403 = vmatpush1.msra.mxu0 0.0
  %404 = vmatprep.subr.mxu0 0.0
  %405 = vmatpush1.msra.mxu0 0.0
  %406 = vmatprep.subr.mxu0 0.0
  %407 = vmatpush1.msra.mxu0 0.0
  %408 = vmatprep.mubr.f32.mxu0 0.0
  %409 = vmatmul.mubr.f32.gmra.mrb[0].mxu0 %v318
  %v410 = vpop.f32.mrb[0].mxu0
  %v411 = vadd.f32 %v342, %v410
  %v412 = vpop.f32.mrb[0].mxu0
  %413 = vdwg.mxu0
  %v414 = vadd.f32 %v411, %v318
  %s415 = scalar_lea.vmem %s5, 256
  %v416 = vld [vmem:[%s415] sm:$0xff]
  %v417 = vld [vmem:[%s415 + $0x8] sm:$0xff]
  %v418 = vld [vmem:[%s415 + $0x10] sm:$0xff]
  %v419 = vld [vmem:[%s415 + $0x18] sm:$0xff]
  %v420 = vld [vmem:[%s415 + $0x20] sm:$0xff]
  %v421 = vld [vmem:[%s415 + $0x28] sm:$0xff]
  %v422 = vld [vmem:[%s415 + $0x30] sm:$0xff]
  %v423 = vld [vmem:[%s415 + $0x38] sm:$0xff]
  %v424 = vld [vmem:[%s415 + $0x40] sm:$0xff]
  %v425 = vld [vmem:[%s415 + $0x48] sm:$0xff]
  %v426 = vld [vmem:[%s415 + $0x50] sm:$0xff]
  %v427 = vld [vmem:[%s415 + $0x58] sm:$0xff]
  %v428 = vld [vmem:[%s415 + $0x60] sm:$0xff]
  %v429 = vld [vmem:[%s415 + $0x68] sm:$0xff]
  %v430 = vld [vmem:[%s415 + $0x70] sm:$0xff]
  %v431 = vld [vmem:[%s415 + $0x78] sm:$0xff]
  %s432 = scalar_lea.vmem %s6, 2
  %v433 = vld [vmem:[%s432] sm:$0x1]
  %v435 = vlaneseq
  %v436 = vshrl.u32 %v435, 7
  %v437 = vsub.s32 0, %v436
  %v438 = vrot.slane %v433, %v437
  %440 = vmatprep.subr.mxu0 0.0
  %441 = vmatpush1.msra.mxu0 %v416
  %442 = vmatprep.subr.mxu0 0.0
  %443 = vmatpush1.msra.mxu0 %v417
  %444 = vmatprep.subr.mxu0 0.0
  %445 = vmatpush1.msra.mxu0 %v418
  %446 = vmatprep.subr.mxu0 0.0
  %447 = vmatpush1.msra.mxu0 %v419
  %448 = vmatprep.subr.mxu0 0.0
  %449 = vmatpush1.msra.mxu0 %v420
  %450 = vmatprep.subr.mxu0 0.0
  %451 = vmatpush1.msra.mxu0 %v421
  %452 = vmatprep.subr.mxu0 0.0
  %453 = vmatpush1.msra.mxu0 %v422
  %454 = vmatprep.subr.mxu0 0.0
  %455 = vmatpush1.msra.mxu0 %v423
  %456 = vmatprep.subr.mxu0 0.0
  %457 = vmatpush1.msra.mxu0 %v424
  %458 = vmatprep.subr.mxu0 0.0
  %459 = vmatpush1.msra.mxu0 %v425
  %460 = vmatprep.subr.mxu0 0.0
  %461 = vmatpush1.msra.mxu0 %v426
  %462 = vmatprep.subr.mxu0 0.0
  %463 = vmatpush1.msra.mxu0 %v427
  %464 = vmatprep.subr.mxu0 0.0
  %465 = vmatpush1.msra.mxu0 %v428
  %466 = vmatprep.subr.mxu0 0.0
  %467 = vmatpush1.msra.mxu0 %v429
  %468 = vmatprep.subr.mxu0 0.0
  %469 = vmatpush1.msra.mxu0 %v430
  %470 = vmatprep.subr.mxu0 0.0
  %471 = vmatpush1.msra.mxu0 %v431
  %472 = vmatprep.subr.mxu0 0.0
  %473 = vmatpush1.msra.mxu0 0.0
  %474 = vmatprep.subr.mxu0 0.0
  %475 = vmatpush1.msra.mxu0 0.0
  %476 = vmatprep.subr.mxu0 0.0
  %477 = vmatpush1.msra.mxu0 0.0
  %478 = vmatprep.subr.mxu0 0.0
  %479 = vmatpush1.msra.mxu0 0.0
  %480 = vmatprep.subr.mxu0 0.0
  %481 = vmatpush1.msra.mxu0 0.0
  %482 = vmatprep.subr.mxu0 0.0
  %483 = vmatpush1.msra.mxu0 0.0
  %484 = vmatprep.subr.mxu0 0.0
  %485 = vmatpush1.msra.mxu0 0.0
  %486 = vmatprep.subr.mxu0 0.0
  %487 = vmatpush1.msra.mxu0 0.0
  %488 = vmatprep.subr.mxu0 0.0
  %489 = vmatpush1.msra.mxu0 0.0
  %490 = vmatprep.subr.mxu0 0.0
  %491 = vmatpush1.msra.mxu0 0.0
  %492 = vmatprep.subr.mxu0 0.0
  %493 = vmatpush1.msra.mxu0 0.0
  %494 = vmatprep.subr.mxu0 0.0
  %495 = vmatpush1.msra.mxu0 0.0
  %496 = vmatprep.subr.mxu0 0.0
  %497 = vmatpush1.msra.mxu0 0.0
  %498 = vmatprep.subr.mxu0 0.0
  %499 = vmatpush1.msra.mxu0 0.0
  %500 = vmatprep.subr.mxu0 0.0
  %501 = vmatpush1.msra.mxu0 0.0
  %502 = vmatprep.subr.mxu0 0.0
  %503 = vmatpush1.msra.mxu0 0.0
  %504 = vmatprep.mubr.f32.mxu0 0.0
  %505 = vmatmul.mubr.f32.gmra.mrb[0].mxu0 %v414
  %v506 = vpop.f32.mrb[0].mxu0
  %v507 = vadd.f32 %v438, %v506
  %v508 = vpop.f32.mrb[0].mxu0
  %509 = vdwg.mxu0
  %v510 = vadd.f32 %v507, %v414
  %v511 = vld [vmem:[%s7] sm:$0xff]
  %v512 = vld [vmem:[%s7 + $0x8] sm:$0xff]
  %v513 = vld [vmem:[%s7 + $0x10] sm:$0xff]
  %v514 = vld [vmem:[%s7 + $0x18] sm:$0xff]
  %v515 = vld [vmem:[%s7 + $0x20] sm:$0xff]
  %v516 = vld [vmem:[%s7 + $0x28] sm:$0xff]
  %v517 = vld [vmem:[%s7 + $0x30] sm:$0xff]
  %v518 = vld [vmem:[%s7 + $0x38] sm:$0xff]
  %v519 = vld [vmem:[%s7 + $0x40] sm:$0xff]
  %v520 = vld [vmem:[%s7 + $0x48] sm:$0xff]
  %v521 = vld [vmem:[%s7 + $0x50] sm:$0xff]
  %v522 = vld [vmem:[%s7 + $0x58] sm:$0xff]
  %v523 = vld [vmem:[%s7 + $0x60] sm:$0xff]
  %v524 = vld [vmem:[%s7 + $0x68] sm:$0xff]
  %v525 = vld [vmem:[%s7 + $0x70] sm:$0xff]
  %v526 = vld [vmem:[%s7 + $0x78] sm:$0xff]
  %v527 = vld [vmem:[%s8] sm:$0x1]
  %v529 = vlaneseq
  %v530 = vshrl.u32 %v529, 7
  %v531 = vsub.s32 0, %v530
  %v532 = vrot.slane %v527, %v531
  %534 = vmatprep.subr.mxu0 0.0
  %535 = vmatpush1.msra.mxu0 %v511
  %536 = vmatprep.subr.mxu0 0.0
  %537 = vmatpush1.msra.mxu0 %v512
  %538 = vmatprep.subr.mxu0 0.0
  %539 = vmatpush1.msra.mxu0 %v513
  %540 = vmatprep.subr.mxu0 0.0
  %541 = vmatpush1.msra.mxu0 %v514
  %542 = vmatprep.subr.mxu0 0.0
  %543 = vmatpush1.msra.mxu0 %v515
  %544 = vmatprep.subr.mxu0 0.0
  %545 = vmatpush1.msra.mxu0 %v516
  %546 = vmatprep.subr.mxu0 0.0
  %547 = vmatpush1.msra.mxu0 %v517
  %548 = vmatprep.subr.mxu0 0.0
  %549 = vmatpush1.msra.mxu0 %v518
  %550 = vmatprep.subr.mxu0 0.0
  %551 = vmatpush1.msra.mxu0 %v519
  %552 = vmatprep.subr.mxu0 0.0
  %553 = vmatpush1.msra.mxu0 %v520
  %554 = vmatprep.subr.mxu0 0.0
  %555 = vmatpush1.msra.mxu0 %v521
  %556 = vmatprep.subr.mxu0 0.0
  %557 = vmatpush1.msra.mxu0 %v522
  %558 = vmatprep.subr.mxu0 0.0
  %559 = vmatpush1.msra.mxu0 %v523
  %560 = vmatprep.subr.mxu0 0.0
  %561 = vmatpush1.msra.mxu0 %v524
  %562 = vmatprep.subr.mxu0 0.0
  %563 = vmatpush1.msra.mxu0 %v525
  %564 = vmatprep.subr.mxu0 0.0
  %565 = vmatpush1.msra.mxu0 %v526
  %566 = vmatprep.subr.mxu0 0.0
  %567 = vmatpush1.msra.mxu0 0.0
  %568 = vmatprep.subr.mxu0 0.0
  %569 = vmatpush1.msra.mxu0 0.0
  %570 = vmatprep.subr.mxu0 0.0
  %571 = vmatpush1.msra.mxu0 0.0
  %572 = vmatprep.subr.mxu0 0.0
  %573 = vmatpush1.msra.mxu0 0.0
  %574 = vmatprep.subr.mxu0 0.0
  %575 = vmatpush1.msra.mxu0 0.0
  %576 = vmatprep.subr.mxu0 0.0
  %577 = vmatpush1.msra.mxu0 0.0
  %578 = vmatprep.subr.mxu0 0.0
  %579 = vmatpush1.msra.mxu0 0.0
  %580 = vmatprep.subr.mxu0 0.0
  %581 = vmatpush1.msra.mxu0 0.0
  %582 = vmatprep.subr.mxu0 0.0
  %583 = vmatpush1.msra.mxu0 0.0
  %584 = vmatprep.subr.mxu0 0.0
  %585 = vmatpush1.msra.mxu0 0.0
  %586 = vmatprep.subr.mxu0 0.0
  %587 = vmatpush1.msra.mxu0 0.0
  %588 = vmatprep.subr.mxu0 0.0
  %589 = vmatpush1.msra.mxu0 0.0
  %590 = vmatprep.subr.mxu0 0.0
  %591 = vmatpush1.msra.mxu0 0.0
  %592 = vmatprep.subr.mxu0 0.0
  %593 = vmatpush1.msra.mxu0 0.0
  %594 = vmatprep.subr.mxu0 0.0
  %595 = vmatpush1.msra.mxu0 0.0
  %596 = vmatprep.subr.mxu0 0.0
  %597 = vmatpush1.msra.mxu0 0.0
  %598 = vmatprep.mubr.f32.mxu0 0.0
  %599 = vmatmul.mubr.f32.gmra.mrb[0].mxu0 %v510
  %v600 = vpop.f32.mrb[0].mxu0
  %v601 = vadd.f32 %v532, %v600
  %v602 = vpop.f32.mrb[0].mxu0
  %603 = vdwg.mxu0
  %vm604 = vcmp.gt.f32.partialorder %v601, 0.0
  %v605 = vmul.f32 %v601, 0.2
  %v606 = vsel %vm604, %v601, %v605
  %v607 = vld [vmem:[%s9] sm:$0xff]
  %v608 = vld [vmem:[%s9 + $0x8] sm:$0xff]
  %v609 = vld [vmem:[%s9 + $0x10] sm:$0xff]
  %v610 = vld [vmem:[%s9 + $0x18] sm:$0xff]
  %v611 = vld [vmem:[%s9 + $0x20] sm:$0xff]
  %v612 = vld [vmem:[%s9 + $0x28] sm:$0xff]
  %v613 = vld [vmem:[%s9 + $0x30] sm:$0xff]
  %v614 = vld [vmem:[%s9 + $0x38] sm:$0xff]
  %v615 = vld [vmem:[%s9 + $0x40] sm:$0xff]
  %v616 = vld [vmem:[%s9 + $0x48] sm:$0xff]
  %v617 = vld [vmem:[%s9 + $0x50] sm:$0xff]
  %v618 = vld [vmem:[%s9 + $0x58] sm:$0xff]
  %v619 = vld [vmem:[%s9 + $0x60] sm:$0xff]
  %v620 = vld [vmem:[%s9 + $0x68] sm:$0xff]
  %v621 = vld [vmem:[%s9 + $0x70] sm:$0xff]
  %v622 = vld [vmem:[%s9 + $0x78] sm:$0xff]
  %v623 = vld [vmem:[%s10] sm:$0x1]
  %v625 = vlaneseq
  %v626 = vshrl.u32 %v625, 7
  %v627 = vsub.s32 0, %v626
  %v628 = vrot.slane %v623, %v627
  %630 = vmatprep.subr.mxu0 0.0
  %631 = vmatpush1.msra.mxu0 %v607
  %632 = vmatprep.subr.mxu0 0.0
  %633 = vmatpush1.msra.mxu0 %v608
  %634 = vmatprep.subr.mxu0 0.0
  %635 = vmatpush1.msra.mxu0 %v609
  %636 = vmatprep.subr.mxu0 0.0
  %637 = vmatpush1.msra.mxu0 %v610
  %638 = vmatprep.subr.mxu0 0.0
  %639 = vmatpush1.msra.mxu0 %v611
  %640 = vmatprep.subr.mxu0 0.0
  %641 = vmatpush1.msra.mxu0 %v612
  %642 = vmatprep.subr.mxu0 0.0
  %643 = vmatpush1.msra.mxu0 %v613
  %644 = vmatprep.subr.mxu0 0.0
  %645 = vmatpush1.msra.mxu0 %v614
  %646 = vmatprep.subr.mxu0 0.0
  %647 = vmatpush1.msra.mxu0 %v615
  %648 = vmatprep.subr.mxu0 0.0
  %649 = vmatpush1.msra.mxu0 %v616
  %650 = vmatprep.subr.mxu0 0.0
  %651 = vmatpush1.msra.mxu0 %v617
  %652 = vmatprep.subr.mxu0 0.0
  %653 = vmatpush1.msra.mxu0 %v618
  %654 = vmatprep.subr.mxu0 0.0
  %655 = vmatpush1.msra.mxu0 %v619
  %656 = vmatprep.subr.mxu0 0.0
  %657 = vmatpush1.msra.mxu0 %v620
  %658 = vmatprep.subr.mxu0 0.0
  %659 = vmatpush1.msra.mxu0 %v621
  %660 = vmatprep.subr.mxu0 0.0
  %661 = vmatpush1.msra.mxu0 %v622
  %662 = vmatprep.subr.mxu0 0.0
  %663 = vmatpush1.msra.mxu0 0.0
  %664 = vmatprep.subr.mxu0 0.0
  %665 = vmatpush1.msra.mxu0 0.0
  %666 = vmatprep.subr.mxu0 0.0
  %667 = vmatpush1.msra.mxu0 0.0
  %668 = vmatprep.subr.mxu0 0.0
  %669 = vmatpush1.msra.mxu0 0.0
  %670 = vmatprep.subr.mxu0 0.0
  %671 = vmatpush1.msra.mxu0 0.0
  %672 = vmatprep.subr.mxu0 0.0
  %673 = vmatpush1.msra.mxu0 0.0
  %674 = vmatprep.subr.mxu0 0.0
  %675 = vmatpush1.msra.mxu0 0.0
  %676 = vmatprep.subr.mxu0 0.0
  %677 = vmatpush1.msra.mxu0 0.0
  %678 = vmatprep.subr.mxu0 0.0
  %679 = vmatpush1.msra.mxu0 0.0
  %680 = vmatprep.subr.mxu0 0.0
  %681 = vmatpush1.msra.mxu0 0.0
  %682 = vmatprep.subr.mxu0 0.0
  %683 = vmatpush1.msra.mxu0 0.0
  %684 = vmatprep.subr.mxu0 0.0
  %685 = vmatpush1.msra.mxu0 0.0
  %686 = vmatprep.subr.mxu0 0.0
  %687 = vmatpush1.msra.mxu0 0.0
  %688 = vmatprep.subr.mxu0 0.0
  %689 = vmatpush1.msra.mxu0 0.0
  %690 = vmatprep.subr.mxu0 0.0
  %691 = vmatpush1.msra.mxu0 0.0
  %692 = vmatprep.subr.mxu0 0.0
  %693 = vmatpush1.msra.mxu0 0.0
  %694 = vmatprep.mubr.f32.mxu0 0.0
  %695 = vmatmul.mubr.f32.gmra.mrb[0].mxu0 %v606
  %v696 = vpop.f32.mrb[0].mxu0
  %v697 = vadd.f32 %v628, %v696
  %v698 = vpop.f32.mrb[0].mxu0
  %699 = vdwg.mxu0
  %vm700 = vcmp.gt.f32.partialorder %v697, 0.0
  %v701 = vmul.f32 %v697, 0.2
  %v702 = vsel %vm700, %v697, %v701
  %703 = vst [vmem:[%s11] sm:$0xff] %v702
  // Predicated region
  $region46: #{embeding_block_forward.1} parent=0 // pred_check
    _
  $region47: #{embeding_block_forward.1} parent=0 // pred_check_branch
    %705 = sbr.rel (0) target = $region49
  $region48: #{embeding_block_forward.1} parent=0 // pred_region
    _
  $region49: #{embeding_block_forward.1} parent=0 // pred_fallthru
    _
  // Predicated region
  $region50: #{embeding_block_forward.1} parent=0 // pred_check
    _
  $region51: #{embeding_block_forward.1} parent=0 // pred_check_branch
    %707 = sbr.rel (0) target = $region53
  $region52: #{embeding_block_forward.1} parent=0 // pred_region
    _
  $region53: #{embeding_block_forward.1} parent=0 // pred_fallthru
    _

</llo_original>
